<compile_context>
chip_gen: v7x
topology: tpu7x:2x2x1
jax: 0.10.0
libtpu: 0.0.40
codegen_flags: <defaults>
</compile_context>

<pallas_src>
import functools

import jax
import jax.numpy as jnp
from jax.experimental import pallas as pl
from jax.experimental.pallas import tpu as pltpu


# Raise the scoped VMEM limit above the 32 MiB default (v5e/v6e have 128 MiB
# physical) while staying under v7x's 64 MiB physical VMEM.
_VMEM_LIMIT_BYTES = 48 * 1024 * 1024
# Tile-picker budget (leaves headroom below the limit for internal scratch).
_VMEM_TILE_BUDGET = 40 * 1024 * 1024


# ---------------------------------------------------------------------------
# Kernel 1: fused Q/K/V projection (bf16 MXU operands, f32 accumulation).
# ---------------------------------------------------------------------------
def _project_and_store(x_bf, w_ref, out_ref, heads, dim_head, scale=None):
    # Full-width (TN, E) @ (E, H*D) matmul keeps the MXU output dimension wide.
    p = jnp.dot(x_bf, w_ref[...], preferred_element_type=jnp.float32)
    if scale is not None:
        p = p * scale                                   # fold softmax scale into q
    p = p.astype(jnp.bfloat16)                          # cast once (halves shuffle bytes)
    tn = p.shape[0]
    # One layout-aware reshuffle (TN, H*D) -> (H, TN, D) + one full-block store
    # (replaces the previous per-head lane-slice / masked-store loop).
    out_ref[0] = jnp.transpose(p.reshape(tn, heads, dim_head), (1, 0, 2))


def qkv_proj_kernel(x_ref, wq_ref, wk_ref, wv_ref,
                    q_ref, k_ref, v_ref,
                    *, heads, dim_head, scale):
    x = x_ref[0].astype(jnp.bfloat16)                   # (TN, E)
    # Sequential compute + store: only one (TN, H*D) product live at a time.
    _project_and_store(x, wq_ref, q_ref, heads, dim_head, scale)
    _project_and_store(x, wk_ref, k_ref, heads, dim_head)
    _project_and_store(x, wv_ref, v_ref, heads, dim_head)


# ---------------------------------------------------------------------------
# Kernel 2: attention (q-tiled) + fc_out projection + GLU, accumulated over
# the head grid axis.
# ---------------------------------------------------------------------------
def attention_kernel(q_ref, k_ref, v_ref, woa_ref, wob_ref, ba_ref, bb_ref,
                     out_ref, pre_ref, post_ref,
                     acc_a, acc_b):
    h = pl.program_id(2)

    @pl.when(h == 0)
    def _():
        acc_a[...] = jnp.zeros_like(acc_a)
        acc_b[...] = jnp.zeros_like(acc_b)

    qh = q_ref[0, 0]                                    # (TQ, D) bf16, pre-scaled
    kh = k_ref[0, 0]                                    # (N,  D) bf16
    vh = v_ref[0, 0]                                    # (N,  D) bf16

    # energy = (q * scale) @ k^T, contracting both operands on the last dim
    # -> no in-kernel K transpose (XLU) before the MXU push.
    energy = jax.lax.dot_general(
        qh, kh, dimension_numbers=(((1,), (1,)), ((), ())),
        preferred_element_type=jnp.float32)             # (TQ, N) f32
    pre_ref[0, 0] = energy.astype(pre_ref.dtype)        # pre_softmax_attn (bf16 store)

    # Exact softmax over the full kv row, math in f32.
    m = jnp.max(energy, axis=-1, keepdims=True)
    e = jnp.exp(energy - m)
    # TODO(synk): on v6e/v7x the exp could run in bf16 for EUP throughput; kept
    #             f32 so the same kernel stays correct/fast on v5e.
    s = jnp.sum(e, axis=-1, keepdims=True)
    attn = e * pl.reciprocal(s, approx=False)           # exact: rows sum to 1
    post_ref[0, 0] = attn.astype(post_ref.dtype)        # post_softmax_attn (bf16 store)

    # attn @ V in bf16 with f32 accumulation.
    o = jnp.dot(attn.astype(jnp.bfloat16), vh,
                preferred_element_type=jnp.float32)     # (TQ, D)
    o = o.astype(jnp.bfloat16)

    # fc_out decomposes over heads: concat_h(o_h) @ Wo == sum_h o_h @ Wo_h.
    # The (H, D, E) weight slabs are resident in VMEM (constant index_map);
    # dynamic leading-axis indexing selects the current head with no DMA churn.
    acc_a[...] += jnp.dot(o, woa_ref[h], preferred_element_type=jnp.float32)
    acc_b[...] += jnp.dot(o, wob_ref[h], preferred_element_type=jnp.float32)

    @pl.when(h == pl.num_programs(2) - 1)
    def _():
        a = acc_a[...] + ba_ref[...]
        b = acc_b[...] + bb_ref[...]
        out_ref[0] = (a * jax.nn.sigmoid(b)).astype(out_ref.dtype)   # GLU


# ---------------------------------------------------------------------------
# Tile selection (VMEM-aware for kernel 2).
# ---------------------------------------------------------------------------
def _pick_seq_tile(n):
    for t in (256, 128):
        if n % t == 0:
            return t
    return n


def _kernel2_vmem_bytes(tq, n, h, d, e):
    bf16, f32 = 2, 4
    by = 2 * tq * d * bf16                 # q block (double-buffered)
    by += 2 * 2 * n * d * bf16             # k + v blocks
    by += 2 * 2 * h * d * e * bf16         # Wo_a + Wo_b (counted double to be safe)
    by += 2 * 2 * e * f32                  # biases
    by += 2 * tq * e * f32                 # out block
    by += 2 * 2 * tq * n * bf16            # pre + post score blocks (bf16)
    by += 2 * tq * e * f32                 # two f32 accumulators
    return by


def _pick_q_tile(n, h, d, e, budget=_VMEM_TILE_BUDGET):
    # Largest q tile whose kernel-2 VMEM estimate fits the budget (v7x-safe);
    # v6e/v5e get the same big tiles thanks to bf16 pre/post blocks.
    fallback = None
    for t in (512, 256, 128, 64, 32, 16, 8):
        if n % t == 0:
            if _kernel2_vmem_bytes(t, n, h, d, e) <= budget:
                return t
            fallback = t
    return fallback if fallback is not None else n


# ---------------------------------------------------------------------------
# Wrapper
# ---------------------------------------------------------------------------
def multi_head_attention(x, wq, wk, wv, wo, bo, *, heads, dim_head,
                         q_tile=None, n_tile=None):
    B, N, E = x.shape
    H, D = heads, dim_head
    dim_v = H * D
    scale = D ** (-0.5)

    TN = n_tile if n_tile is not None else _pick_seq_tile(N)
    TQ = q_tile if q_tile is not None else _pick_q_tile(N, H, D, E)
    assert N % TN == 0 and N % TQ == 0, "sequence length must divide the tiles"
    # Note (v7x megacore): with B >= 2 the parallel axes B*(N//TQ) >= 2 so both
    # TensorCores receive grid steps.

    # bf16 MXU operands (cast once, outside the grid).
    wq_bf = wq.astype(jnp.bfloat16)
    wk_bf = wk.astype(jnp.bfloat16)
    wv_bf = wv.astype(jnp.bfloat16)

    k1_cost = pl.CostEstimate(
        flops=2 * B * N * E * 3 * dim_v,
        transcendentals=0,
        bytes_accessed=(B * N * E * 4 + 3 * E * dim_v * 2 + 3 * B * N * dim_v * 2))

    # ---- Kernel 1: projections -> head-major (B, H, N, D) bf16 ------------
    q, k, v = pl.pallas_call(
        functools.partial(qkv_proj_kernel, heads=H, dim_head=D, scale=scale),
        out_shape=tuple(jax.ShapeDtypeStruct((B, H, N, D), jnp.bfloat16)
                        for _ in range(3)),
        grid_spec=pltpu.PrefetchScalarGridSpec(
            num_scalar_prefetch=0,
            grid=(B, N // TN),
            in_specs=[
                pl.BlockSpec((1, TN, E), lambda b, i: (b, i, 0)),       # x tile
                pl.BlockSpec((E, dim_v), lambda b, i: (0, 0)),          # Wq (resident)
                pl.BlockSpec((E, dim_v), lambda b, i: (0, 0)),          # Wk (resident)
                pl.BlockSpec((E, dim_v), lambda b, i: (0, 0)),          # Wv (resident)
            ],
            out_specs=[
                pl.BlockSpec((1, H, TN, D), lambda b, i: (b, 0, i, 0)),
                pl.BlockSpec((1, H, TN, D), lambda b, i: (b, 0, i, 0)),
                pl.BlockSpec((1, H, TN, D), lambda b, i: (b, 0, i, 0)),
            ],
        ),
        compiler_params=pltpu.CompilerParams(
            dimension_semantics=("parallel", "parallel"),
            vmem_limit_bytes=_VMEM_LIMIT_BYTES),
        cost_estimate=k1_cost,
    )(x, wq_bf, wk_bf, wv_bf)

    # fc_out weights split per head and per GLU half (done once, in XLA).
    wo_a = wo[:, :E].reshape(H, D, E).astype(jnp.bfloat16)              # (H, D, E)
    wo_b = wo[:, E:].reshape(H, D, E).astype(jnp.bfloat16)              # (H, D, E)
    bo_a = bo[:, :E]                                                    # (1, E) f32
    bo_b = bo[:, E:]                                                    # (1, E) f32

    k2_cost = pl.CostEstimate(
        flops=4 * B * H * N * N * D + 4 * B * H * N * D * E,
        transcendentals=B * H * N * N + B * N * E,
        bytes_accessed=(2 * B * H * N * N * 2          # bf16 pre/post writes (dominant)
                        + 3 * B * H * N * D * 2        # q/k/v reads
                        + B * N * E * 4                # fc_out output
                        + 2 * H * D * E * 2))          # Wo slabs

    # ---- Kernel 2: attention + fc_out + GLU --------------------------------
    out, pre, post = pl.pallas_call(
        attention_kernel,
        out_shape=(
            jax.ShapeDtypeStruct((B, N, E), jnp.float32),               # fc_out output
            jax.ShapeDtypeStruct((B, H, N, N), jnp.bfloat16),           # pre_softmax_attn
            jax.ShapeDtypeStruct((B, H, N, N), jnp.bfloat16),           # post_softmax_attn
        ),
        grid_spec=pltpu.PrefetchScalarGridSpec(
            num_scalar_prefetch=0,
            grid=(B, N // TQ, H),                                       # head (reduction) axis last
            in_specs=[
                pl.BlockSpec((1, 1, TQ, D), lambda b, qi, h: (b, h, qi, 0)),  # q tile
                pl.BlockSpec((1, 1, N, D),  lambda b, qi, h: (b, h, 0, 0)),   # k (full rows)
                pl.BlockSpec((1, 1, N, D),  lambda b, qi, h: (b, h, 0, 0)),   # v (full rows)
                pl.BlockSpec((H, D, E), lambda b, qi, h: (0, 0, 0)),          # Wo_a (resident)
                pl.BlockSpec((H, D, E), lambda b, qi, h: (0, 0, 0)),          # Wo_b (resident)
                pl.BlockSpec((1, E), lambda b, qi, h: (0, 0)),                # bias a
                pl.BlockSpec((1, E), lambda b, qi, h: (0, 0)),                # bias b
            ],
            out_specs=[
                pl.BlockSpec((1, TQ, E), lambda b, qi, h: (b, qi, 0)),        # resident over h
                pl.BlockSpec((1, 1, TQ, N), lambda b, qi, h: (b, h, qi, 0)),  # lane-dense (N last)
                pl.BlockSpec((1, 1, TQ, N), lambda b, qi, h: (b, h, qi, 0)),
            ],
            scratch_shapes=[
                pltpu.VMEM((TQ, E), jnp.float32),                       # GLU half a accumulator
                pltpu.VMEM((TQ, E), jnp.float32),                       # GLU half b accumulator
            ],
        ),
        compiler_params=pltpu.CompilerParams(
            dimension_semantics=("parallel", "parallel", "arbitrary"),
            vmem_limit_bytes=_VMEM_LIMIT_BYTES),
        cost_estimate=k2_cost,
    )(q, k, v, wo_a, wo_b, bo_a, bo_b)

    return out, pre, post


def reference(x, wq, wk, wv, wo, bo, *, heads, dim_head):
    """Pure-JAX (f32) reference mirroring the PyTorch forward (self-attn)."""
    B, N, E = x.shape
    scale = dim_head ** (-0.5)
    q = x @ wq
    k = x @ wk
    v = x @ wv
    def split_heads(t):  # 'b n (h d) -> b h n d'
        return t.reshape(B, N, heads, dim_head).transpose(0, 2, 1, 3)
    q, k, v = map(split_heads, (q, k, v))
    energy = jnp.einsum('bhid,bhjd->bhij', q, k) * scale
    attn = jax.nn.softmax(energy, axis=-1)
    out = jnp.einsum('bhij,bhjd->bhid', attn, v)
    out = out.transpose(0, 2, 1, 3).reshape(B, N, heads * dim_head)
    proj = out @ wo + bo[0]
    a, b = proj[..., :E], proj[..., E:]
    return a * jax.nn.sigmoid(b), energy, attn


def _run_and_check(B, N, embed_dim, heads, dim_head, seed, **tile_kw):
    dim_qk = dim_v = heads * dim_head
    key = jax.random.PRNGKey(seed)
    kx, kq, kk, kv, ko, kb = jax.random.split(key, 6)

    x = jax.random.normal(kx, (B, N, embed_dim), dtype=jnp.float32)
    wq = jax.random.normal(kq, (embed_dim, dim_qk), dtype=jnp.float32) * 0.05
    wk = jax.random.normal(kk, (embed_dim, dim_qk), dtype=jnp.float32) * 0.05
    wv = jax.random.normal(kv, (embed_dim, dim_v), dtype=jnp.float32) * 0.05
    wo = jax.random.normal(ko, (dim_v, 2 * embed_dim), dtype=jnp.float32) * 0.05
    bo = jax.random.normal(kb, (1, 2 * embed_dim), dtype=jnp.float32) * 0.05

    out, pre, post = multi_head_attention(
        x, wq, wk, wv, wo, bo, heads=heads, dim_head=dim_head, **tile_kw)
    jax.block_until_ready((out, pre, post))

    ref_out, ref_pre, ref_post = reference(
        x, wq, wk, wv, wo, bo, heads=heads, dim_head=dim_head)

    # bf16 MXU operands + bf16 pre/post stores -> wider tolerance vs f32 ref.
    atol = rtol = 2e-2
    assert jnp.allclose(out, ref_out, atol=atol, rtol=rtol)
    assert jnp.allclose(pre.astype(jnp.float32), ref_pre, atol=atol, rtol=rtol)
    assert jnp.allclose(post.astype(jnp.float32), ref_post, atol=atol, rtol=rtol)


if __name__ == "__main__":
    # Config 1: tiny, matches the module's toy shapes (single tile per axis).
    _run_and_check(B=2, N=8, embed_dim=32, heads=2, dim_head=16, seed=0)

    # Config 2: exercises the q-tiled grid, multiple heads and multi-step grids.
    _run_and_check(B=2, N=256, embed_dim=128, heads=4, dim_head=32, seed=1,
                   q_tile=128, n_tile=128)

    print("KERNEL_OK")
</pallas_src>

<mosaic_0001>
module attributes {stable_mosaic.version = 11 : i64} {
  func.func @qkv_proj_kernel(%arg0: i32, %arg1: i32, %arg2: memref<1x8x32xf32, #tpu.memory_space<vmem>>, %arg3: memref<32x32xbf16, #tpu.memory_space<vmem>>, %arg4: memref<32x32xbf16, #tpu.memory_space<vmem>>, %arg5: memref<32x32xbf16, #tpu.memory_space<vmem>>, %arg6: memref<1x2x8x16xbf16, #tpu.memory_space<vmem>>, %arg7: memref<1x2x8x16xbf16, #tpu.memory_space<vmem>>, %arg8: memref<1x2x8x16xbf16, #tpu.memory_space<vmem>>) attributes {dimension_semantics = [#tpu.dimension_semantics<parallel>, #tpu.dimension_semantics<parallel>], iteration_bounds = array<i64: 2, 1>, scalar_prefetch = 0 : i64, scratch_operands = 0 : i64, tpu.core_type = #tpu.core_type<tc>, window_params = [{transform_indices = @transform_0, window_bounds = array<i64: 1, 8, 32>}, {pipeline_mode = #tpu.pipeline_mode<synchronous>, transform_indices = @transform_1, window_bounds = array<i64: 32, 32>}, {pipeline_mode = #tpu.pipeline_mode<synchronous>, transform_indices = @transform_2, window_bounds = array<i64: 32, 32>}, {pipeline_mode = #tpu.pipeline_mode<synchronous>, transform_indices = @transform_3, window_bounds = array<i64: 32, 32>}, {transform_indices = @transform_4, window_bounds = array<i64: 1, 2, 8, 16>}, {transform_indices = @transform_5, window_bounds = array<i64: 1, 2, 8, 16>}, {transform_indices = @transform_6, window_bounds = array<i64: 1, 2, 8, 16>}]} {
    %c0 = arith.constant 0 : index
    %c0_0 = arith.constant 0 : index
    %c0_1 = arith.constant 0 : index
    %0 = vector.load %arg2[%c0, %c0_0, %c0_1] : memref<1x8x32xf32, #tpu.memory_space<vmem>>, vector<1x8x32xf32>
    %1 = vector.shape_cast %0 : vector<1x8x32xf32> to vector<8x32xf32>
    %2 = arith.truncf %1 : vector<8x32xf32> to vector<8x32xbf16>
    %c0_2 = arith.constant 0 : index
    %c0_3 = arith.constant 0 : index
    %3 = vector.load %arg3[%c0_2, %c0_3] : memref<32x32xbf16, #tpu.memory_space<vmem>>, vector<32x32xbf16>
    %cst = arith.constant dense<0.000000e+00> : vector<8x32xf32>
    %4 = tpu.matmul %2, %3, %cst {dimension_numbers = #tpu.dot_dimension_numbers<[1], [0], [0], [1], [0, 0, 1, 1], [], []>} : vector<8x32xbf16>, vector<32x32xbf16>, vector<8x32xf32> -> vector<8x32xf32>
    %cst_4 = arith.constant 2.500000e-01 : f32
    %5 = vector.broadcast %cst_4 : f32 to vector<8x32xf32>
    %6 = arith.mulf %4, %5 : vector<8x32xf32>
    %7 = arith.truncf %6 : vector<8x32xf32> to vector<8x32xbf16>
    %8 = vector.shape_cast %7 : vector<8x32xbf16> to vector<8x2x16xbf16>
    %9 = tpu.transpose %8, [1, 0, 2] : vector<8x2x16xbf16> -> vector<2x8x16xbf16>
    %c0_5 = arith.constant 0 : index
    %c0_6 = arith.constant 0 : index
    %c0_7 = arith.constant 0 : index
    %c0_8 = arith.constant 0 : index
    %10 = vector.load %arg6[%c0_5, %c0_6, %c0_7, %c0_8] : memref<1x2x8x16xbf16, #tpu.memory_space<vmem>>, vector<1x2x8x16xbf16>
    %11 = vector.shape_cast %10 : vector<1x2x8x16xbf16> to vector<2x8x16xbf16>
    %12 = vector.shape_cast %9 : vector<2x8x16xbf16> to vector<1x2x8x16xbf16>
    tpu.vector_store %arg6[%c0_5, %c0_6, %c0_7, %c0_8], %12 {strides = array<i32>} : memref<1x2x8x16xbf16, #tpu.memory_space<vmem>>, vector<1x2x8x16xbf16>,
    %c0_9 = arith.constant 0 : index
    %c0_10 = arith.constant 0 : index
    %13 = vector.load %arg4[%c0_9, %c0_10] : memref<32x32xbf16, #tpu.memory_space<vmem>>, vector<32x32xbf16>
    %cst_11 = arith.constant dense<0.000000e+00> : vector<8x32xf32>
    %14 = tpu.matmul %2, %13, %cst_11 {dimension_numbers = #tpu.dot_dimension_numbers<[1], [0], [0], [1], [0, 0, 1, 1], [], []>} : vector<8x32xbf16>, vector<32x32xbf16>, vector<8x32xf32> -> vector<8x32xf32>
    %15 = arith.truncf %14 : vector<8x32xf32> to vector<8x32xbf16>
    %16 = vector.shape_cast %15 : vector<8x32xbf16> to vector<8x2x16xbf16>
    %17 = tpu.transpose %16, [1, 0, 2] : vector<8x2x16xbf16> -> vector<2x8x16xbf16>
    %c0_12 = arith.constant 0 : index
    %c0_13 = arith.constant 0 : index
    %c0_14 = arith.constant 0 : index
    %c0_15 = arith.constant 0 : index
    %18 = vector.load %arg7[%c0_12, %c0_13, %c0_14, %c0_15] : memref<1x2x8x16xbf16, #tpu.memory_space<vmem>>, vector<1x2x8x16xbf16>
    %19 = vector.shape_cast %18 : vector<1x2x8x16xbf16> to vector<2x8x16xbf16>
    %20 = vector.shape_cast %17 : vector<2x8x16xbf16> to vector<1x2x8x16xbf16>
    tpu.vector_store %arg7[%c0_12, %c0_13, %c0_14, %c0_15], %20 {strides = array<i32>} : memref<1x2x8x16xbf16, #tpu.memory_space<vmem>>, vector<1x2x8x16xbf16>,
    %c0_16 = arith.constant 0 : index
    %c0_17 = arith.constant 0 : index
    %21 = vector.load %arg5[%c0_16, %c0_17] : memref<32x32xbf16, #tpu.memory_space<vmem>>, vector<32x32xbf16>
    %cst_18 = arith.constant dense<0.000000e+00> : vector<8x32xf32>
    %22 = tpu.matmul %2, %21, %cst_18 {dimension_numbers = #tpu.dot_dimension_numbers<[1], [0], [0], [1], [0, 0, 1, 1], [], []>} : vector<8x32xbf16>, vector<32x32xbf16>, vector<8x32xf32> -> vector<8x32xf32>
    %23 = arith.truncf %22 : vector<8x32xf32> to vector<8x32xbf16>
    %24 = vector.shape_cast %23 : vector<8x32xbf16> to vector<8x2x16xbf16>
    %25 = tpu.transpose %24, [1, 0, 2] : vector<8x2x16xbf16> -> vector<2x8x16xbf16>
    %c0_19 = arith.constant 0 : index
    %c0_20 = arith.constant 0 : index
    %c0_21 = arith.constant 0 : index
    %c0_22 = arith.constant 0 : index
    %26 = vector.load %arg8[%c0_19, %c0_20, %c0_21, %c0_22] : memref<1x2x8x16xbf16, #tpu.memory_space<vmem>>, vector<1x2x8x16xbf16>
    %27 = vector.shape_cast %26 : vector<1x2x8x16xbf16> to vector<2x8x16xbf16>
    %28 = vector.shape_cast %25 : vector<2x8x16xbf16> to vector<1x2x8x16xbf16>
    tpu.vector_store %arg8[%c0_19, %c0_20, %c0_21, %c0_22], %28 {strides = array<i32>} : memref<1x2x8x16xbf16, #tpu.memory_space<vmem>>, vector<1x2x8x16xbf16>,
    return
  }
  func.func @transform_0(%arg0: i32, %arg1: i32) -> (i32, i32, i32) {
    %c0_i32 = arith.constant 0 : i32
    %c0_i32_0 = arith.constant 0 : i32
    return %arg0, %arg1, %c0_i32 : i32, i32, i32
  }
  func.func @transform_1(%arg0: i32, %arg1: i32) -> (i32, i32) {
    %c0_i32 = arith.constant 0 : i32
    %c0_i32_0 = arith.constant 0 : i32
    %c0_i32_1 = arith.constant 0 : i32
    return %c0_i32, %c0_i32_0 : i32, i32
  }
  func.func @transform_2(%arg0: i32, %arg1: i32) -> (i32, i32) {
    %c0_i32 = arith.constant 0 : i32
    %c0_i32_0 = arith.constant 0 : i32
    %c0_i32_1 = arith.constant 0 : i32
    return %c0_i32, %c0_i32_0 : i32, i32
  }
  func.func @transform_3(%arg0: i32, %arg1: i32) -> (i32, i32) {
    %c0_i32 = arith.constant 0 : i32
    %c0_i32_0 = arith.constant 0 : i32
    %c0_i32_1 = arith.constant 0 : i32
    return %c0_i32, %c0_i32_0 : i32, i32
  }
  func.func @transform_4(%arg0: i32, %arg1: i32) -> (i32, i32, i32, i32) {
    %c0_i32 = arith.constant 0 : i32
    %c0_i32_0 = arith.constant 0 : i32
    %c0_i32_1 = arith.constant 0 : i32
    return %arg0, %c0_i32, %arg1, %c0_i32_0 : i32, i32, i32, i32
  }
  func.func @transform_5(%arg0: i32, %arg1: i32) -> (i32, i32, i32, i32) {
    %c0_i32 = arith.constant 0 : i32
    %c0_i32_0 = arith.constant 0 : i32
    %c0_i32_1 = arith.constant 0 : i32
    return %arg0, %c0_i32, %arg1, %c0_i32_0 : i32, i32, i32, i32
  }
  func.func @transform_6(%arg0: i32, %arg1: i32) -> (i32, i32, i32, i32) {
    %c0_i32 = arith.constant 0 : i32
    %c0_i32_0 = arith.constant 0 : i32
    %c0_i32_1 = arith.constant 0 : i32
    return %arg0, %c0_i32, %arg1, %c0_i32_0 : i32, i32, i32, i32
  }
}

</mosaic_0001>

<llo_original>
// kernel: tpu_custom_call.1
$region0: #{tpu_custom_call.1}
  #allocation0 [shape = 'u32[]', space=smem, size = 0x4, offset = 0x4, fixed_abs, tag = 'smem constant byte address 0x4 - core index']
  #allocation1 [shape = 'u32[144,128]{1,0:T(1,128)}', space=vmem, size = 0x12000, scoped, tag = 'internal scratch']
  %s0 = inlined_call_operand.hbm [shape: f32[2,8,32], index: 0, kind: input, shape index: {}]
  %s1 = inlined_call_operand.hbm [shape: bf16[32,32], index: 1, kind: input, shape index: {}]
  %s2 = inlined_call_operand.hbm [shape: bf16[32,32], index: 2, kind: input, shape index: {}]
  %s3 = inlined_call_operand.hbm [shape: bf16[32,32], index: 3, kind: input, shape index: {}]
  %s4 = inlined_call_operand.hbm [shape: bf16[2,2,8,16], index: 4, kind: output, shape index: {0}]
  %s5 = inlined_call_operand.hbm [shape: bf16[2,2,8,16], index: 5, kind: output, shape index: {1}]
  %s6 = inlined_call_operand.hbm [shape: bf16[2,2,8,16], index: 6, kind: output, shape index: {2}]
  %7 = xla_tuple %s4, %s5, %s6
  %s8 = sld [smem:[#allocation0]]
  $region81: #{tpu_custom_call.1} parent=0
    _
  %s10 = ssub.s32 1, %s8
  %s11 = scalar_select 0, %s10, %s8
  $region1: #{tpu_custom_call.1} parent=0
    #allocation2 [shape = 'u8[8192]{0}', space=vmem, size = 0x2000, scoped, tag = 'input window, operand 0']
    #allocation3 [shape = 's32[2]{0}', space=sflag, size = 0x8, scoped, tag = 'scoped memory for tpu_custom_call.1']
    #allocation4 [shape = 's32[2]{0}', space=sflag, size = 0x8, scoped, tag = 'scoped memory for tpu_custom_call.1']
    #allocation5 [shape = 'u8[8192]{0}', space=vmem, size = 0x2000, scoped, tag = 'input window, operand 1, single buffered']
    #allocation6 [shape = 's32[1]{0}', space=sflag, size = 0x4, scoped, tag = 'scoped memory for tpu_custom_call.1']
    #allocation7 [shape = 'u8[8192]{0}', space=vmem, size = 0x2000, scoped, tag = 'input window, operand 2, single buffered']
    #allocation8 [shape = 'u8[8192]{0}', space=vmem, size = 0x2000, scoped, tag = 'input window, operand 3, single buffered']
    #allocation9 [shape = 's32[1]{0}', space=sflag, size = 0x4, scoped, tag = 'scoped memory for tpu_custom_call.1']
    #allocation10 [shape = 'u8[8192]{0}', space=vmem, size = 0x2000, scoped, tag = 'output window, operand 0']
    #allocation11 [shape = 'u8[8192]{0}', space=vmem, size = 0x2000, scoped, tag = 'output window, operand 1']
    #allocation12 [shape = 's32[2]{0}', space=sflag, size = 0x8, scoped, tag = 'scoped memory for tpu_custom_call.1']
    #allocation13 [shape = 'u8[8192]{0}', space=vmem, size = 0x2000, scoped, tag = 'output window, operand 2']
    %12 = vsyncpa [#allocation3], 0
    %s13 = scalar_lea.sflag [#allocation3], 1
    %14 = vsyncpa %s13, 0
    %15 = vsyncpa [#allocation6], 0
    %16 = vsyncpa [#allocation9], 0
    %17 = vsyncpa [#allocation4], 0
    %s18 = scalar_lea.sflag [#allocation4], 1
    %19 = vsyncpa %s18, 0
    %20 = vsyncpa [#allocation12], 0
    %s21 = scalar_lea.sflag [#allocation12], 1
    %22 = vsyncpa %s21, 0
    loop: start=0, step=1, limit=4
    $region2: #{tpu_custom_call.1} parent=1 // loop_pre_header
      _
    $region3: #{tpu_custom_call.1} parent=1 // loop_header
      %s24 = sphi 0, %s28
      %p25 = scmp.ge.s32.totalorder %s24, 4
      %s31 = sphi 0, %s43
      %s32 = sphi 0, %s39
      %s33 = sphi 0, %s31
      %s34 = sphi 0, %s32
      %s35 = sphi 0, %s33
      %s36 = sphi 0, %s34
      %s48 = sphi 0, %s50
      %s51 = sphi 0, %s48
      %s52 = sphi 0, %s51
      %s68 = sphi 0, %s52
      %s72 = sphi 0, %s72
      %s74 = sphi 0, %s72
      %s75 = sphi 0, %s74
      %s89 = sphi 0, %s75
      %s93 = sphi 0, %s93
      %s95 = sphi 0, %s93
      %s96 = sphi 0, %s95
      %s110 = sphi 0, %s96
      %s114 = sphi 0, %s114
      %s116 = sphi 0, %s114
      %s117 = sphi 0, %s116
      %s131 = sphi 0, %s117
      %s139 = sphi 0, %s141
      %s142 = sphi 0, %s139
      %s143 = sphi 0, %s142
      %s159 = sphi 0, %s143
      %s167 = sphi 0, %s169
      %s170 = sphi 0, %s167
      %s171 = sphi 0, %s170
      %s187 = sphi 0, %s171
      %s195 = sphi 0, %s197
      %s198 = sphi 0, %s195
      %s199 = sphi 0, %s198
      %s215 = sphi 0, %s199
    $region4: #{tpu_custom_call.1} parent=1 // loop_header_branch
      %27 = sbr.rel (%p25) target = $region8
    $region5: #{tpu_custom_call.1} parent=1 // loop_body
      %s29 = ssub.s32 %s24, 1
      %s30 = ssub.s32 %s24, 2
      %s37 = sadd.s32 1, %s32
      %p38 = scmp.ge.s32.totalorder %s37, 1
      %s39 = scalar_select %p38, 0, %s37
      %s40 = sadd.s32 1, %s31
      %s41 = scalar_select %p38, %s40, %s31
      %p42 = scmp.ge.s32.totalorder %s41, 2
      %s43 = scalar_select %p42, 0, %s41
      %s44 = ssub.s32 %s31, %s43
      %s45 = ssub.s32 %s32, %s39
      %s46 = sor.u32 %s44, %s45
      %p47 = scmp.eq.s32.totalorder %s46, 0
      %s49 = sadd.s32 %s48, 1
      %s50 = scalar_select %p47, %s48, %s49
      %p53 = pneg %p47
      %p54 = scmp.eq.s32.totalorder %s24, 1
      %p55 = por %p53, %p54
      %p56 = scmp.ne.s32.totalorder %s48, %s51
      %p57 = scmp.eq.s32.totalorder %s24, 0
      %p58 = por %p56, %p57
      %p59 = scmp.ne.s32.totalorder %s48, %s51
      %p60 = scmp.eq.s32.totalorder %s29, 1
      %p61 = por %p59, %p60
      %p62 = scmp.ne.s32.totalorder %s51, %s52
      %p63 = scmp.eq.s32.totalorder %s29, 0
      %p64 = por %p62, %p63
      %p65 = scmp.ne.s32.totalorder %s51, %s52
      %p66 = scmp.eq.s32.totalorder %s30, 1
      %p67 = por %p65, %p66
      %p69 = scmp.ne.s32.totalorder %s52, %s68
      %p70 = scmp.eq.s32.totalorder %s30, 0
      %p71 = por %p69, %p70
      %s73 = sadd.s32 %s72, 1
      %p76 = scmp.eq.s32.totalorder %s24, 1
      %p77 = scmp.ne.s32.totalorder %s72, %s74
      %p78 = scmp.eq.s32.totalorder %s24, 0
      %p79 = por %p77, %p78
      %p80 = scmp.ne.s32.totalorder %s72, %s74
      %p81 = scmp.eq.s32.totalorder %s29, 1
      %p82 = por %p80, %p81
      %p83 = scmp.ne.s32.totalorder %s74, %s75
      %p84 = scmp.eq.s32.totalorder %s29, 0
      %p85 = por %p83, %p84
      %p86 = scmp.ne.s32.totalorder %s74, %s75
      %p87 = scmp.eq.s32.totalorder %s30, 1
      %p88 = por %p86, %p87
      %p90 = scmp.ne.s32.totalorder %s75, %s89
      %p91 = scmp.eq.s32.totalorder %s30, 0
      %p92 = por %p90, %p91
      %s94 = sadd.s32 %s93, 1
      %p97 = scmp.eq.s32.totalorder %s24, 1
      %p98 = scmp.ne.s32.totalorder %s93, %s95
      %p99 = scmp.eq.s32.totalorder %s24, 0
      %p100 = por %p98, %p99
      %p101 = scmp.ne.s32.totalorder %s93, %s95
      %p102 = scmp.eq.s32.totalorder %s29, 1
      %p103 = por %p101, %p102
      %p104 = scmp.ne.s32.totalorder %s95, %s96
      %p105 = scmp.eq.s32.totalorder %s29, 0
      %p106 = por %p104, %p105
      %p107 = scmp.ne.s32.totalorder %s95, %s96
      %p108 = scmp.eq.s32.totalorder %s30, 1
      %p109 = por %p107, %p108
      %p111 = scmp.ne.s32.totalorder %s96, %s110
      %p112 = scmp.eq.s32.totalorder %s30, 0
      %p113 = por %p111, %p112
      %s115 = sadd.s32 %s114, 1
      %p118 = scmp.eq.s32.totalorder %s24, 1
      %p119 = scmp.ne.s32.totalorder %s114, %s116
      %p120 = scmp.eq.s32.totalorder %s24, 0
      %p121 = por %p119, %p120
      %p122 = scmp.ne.s32.totalorder %s114, %s116
      %p123 = scmp.eq.s32.totalorder %s29, 1
      %p124 = por %p122, %p123
      %p125 = scmp.ne.s32.totalorder %s116, %s117
      %p126 = scmp.eq.s32.totalorder %s29, 0
      %p127 = por %p125, %p126
      %p128 = scmp.ne.s32.totalorder %s116, %s117
      %p129 = scmp.eq.s32.totalorder %s30, 1
      %p130 = por %p128, %p129
      %p132 = scmp.ne.s32.totalorder %s117, %s131
      %p133 = scmp.eq.s32.totalorder %s30, 0
      %p134 = por %p132, %p133
      %s135 = ssub.s32 %s31, %s43
      %s136 = ssub.s32 %s32, %s39
      %s137 = sor.u32 %s135, %s136
      %p138 = scmp.eq.s32.totalorder %s137, 0
      %s140 = sadd.s32 %s139, 1
      %s141 = scalar_select %p138, %s139, %s140
      %p144 = pneg %p138
      %p145 = scmp.eq.s32.totalorder %s24, 1
      %p146 = por %p144, %p145
      %p147 = scmp.ne.s32.totalorder %s139, %s142
      %p148 = scmp.eq.s32.totalorder %s24, 0
      %p149 = por %p147, %p148
      %p150 = scmp.ne.s32.totalorder %s139, %s142
      %p151 = scmp.eq.s32.totalorder %s29, 1
      %p152 = por %p150, %p151
      %p153 = scmp.ne.s32.totalorder %s142, %s143
      %p154 = scmp.eq.s32.totalorder %s29, 0
      %p155 = por %p153, %p154
      %p156 = scmp.ne.s32.totalorder %s142, %s143
      %p157 = scmp.eq.s32.totalorder %s30, 1
      %p158 = por %p156, %p157
      %p160 = scmp.ne.s32.totalorder %s143, %s159
      %p161 = scmp.eq.s32.totalorder %s30, 0
      %p162 = por %p160, %p161
      %s163 = ssub.s32 %s31, %s43
      %s164 = ssub.s32 %s32, %s39
      %s165 = sor.u32 %s163, %s164
      %p166 = scmp.eq.s32.totalorder %s165, 0
      %s168 = sadd.s32 %s167, 1
      %s169 = scalar_select %p166, %s167, %s168
      %p172 = pneg %p166
      %p173 = scmp.eq.s32.totalorder %s24, 1
      %p174 = por %p172, %p173
      %p175 = scmp.ne.s32.totalorder %s167, %s170
      %p176 = scmp.eq.s32.totalorder %s24, 0
      %p177 = por %p175, %p176
      %p178 = scmp.ne.s32.totalorder %s167, %s170
      %p179 = scmp.eq.s32.totalorder %s29, 1
      %p180 = por %p178, %p179
      %p181 = scmp.ne.s32.totalorder %s170, %s171
      %p182 = scmp.eq.s32.totalorder %s29, 0
      %p183 = por %p181, %p182
      %p184 = scmp.ne.s32.totalorder %s170, %s171
      %p185 = scmp.eq.s32.totalorder %s30, 1
      %p186 = por %p184, %p185
      %p188 = scmp.ne.s32.totalorder %s171, %s187
      %p189 = scmp.eq.s32.totalorder %s30, 0
      %p190 = por %p188, %p189
      %s191 = ssub.s32 %s31, %s43
      %s192 = ssub.s32 %s32, %s39
      %s193 = sor.u32 %s191, %s192
      %p194 = scmp.eq.s32.totalorder %s193, 0
      %s196 = sadd.s32 %s195, 1
      %s197 = scalar_select %p194, %s195, %s196
      %p200 = pneg %p194
      %p201 = scmp.eq.s32.totalorder %s24, 1
      %p202 = por %p200, %p201
      %p203 = scmp.ne.s32.totalorder %s195, %s198
      %p204 = scmp.eq.s32.totalorder %s24, 0
      %p205 = por %p203, %p204
      %p206 = scmp.ne.s32.totalorder %s195, %s198
      %p207 = scmp.eq.s32.totalorder %s29, 1
      %p208 = por %p206, %p207
      %p209 = scmp.ne.s32.totalorder %s198, %s199
      %p210 = scmp.eq.s32.totalorder %s29, 0
      %p211 = por %p209, %p210
      %p212 = scmp.ne.s32.totalorder %s198, %s199
      %p213 = scmp.eq.s32.totalorder %s30, 1
      %p214 = por %p212, %p213
      %p216 = scmp.ne.s32.totalorder %s199, %s215
      %p217 = scmp.eq.s32.totalorder %s30, 0
      %p218 = por %p216, %p217
      %p219 = scmp.le.s32.totalorder 1, %s24
      %p220 = scmp.lt.s32.totalorder %s24, 3
      %p221 = pnand %p219, %p220
      %p222 = pneg %p221
      // Predicated region
      $region9: #{tpu_custom_call.1} parent=5 // pred_check
        _
      $region10: #{tpu_custom_call.1} parent=5 // pred_check_branch
        %224 = sbr.rel (%p221) target = $region12
      $region11: #{tpu_custom_call.1} parent=5 // pred_region
        %s225 = ssub.s32 %s24, 1
        // Predicated region
        $region13: #{tpu_custom_call.1} parent=11 // pred_check
          %p226 = pneg %p85
        $region14: #{tpu_custom_call.1} parent=11 // pred_check_branch
          %228 = sbr.rel (%p226) target = $region16
        $region15: #{tpu_custom_call.1} parent=11 // pred_region
          %s230 = ssub.s32 256, 256
          %231 = vsyncadd [#allocation6], %s230
          %s232 = sshll.u32 [#allocation5], 4
          %s233 = int_to_ptr.vmem [resolvable:$true] %s232
          %238 = dma.hbm_to_vmem [thread:$0]  %s1, 256, %s233, [#allocation6], 64, 64, 4
        $region16: #{tpu_custom_call.1} parent=11 // pred_fallthru
          _
        // Predicated region
        $region17: #{tpu_custom_call.1} parent=11 // pred_check
          %p239 = pneg %p106
        $region18: #{tpu_custom_call.1} parent=11 // pred_check_branch
          %241 = sbr.rel (%p239) target = $region20
        $region19: #{tpu_custom_call.1} parent=11 // pred_region
          %s243 = ssub.s32 256, 256
          %244 = vsyncadd [#allocation6], %s243
          %s245 = sshll.u32 [#allocation7], 4
          %s246 = int_to_ptr.vmem [resolvable:$true] %s245
          %251 = dma.hbm_to_vmem [thread:$0]  %s2, 256, %s246, [#allocation6], 64, 64, 4
        $region20: #{tpu_custom_call.1} parent=11 // pred_fallthru
          _
        // Predicated region
        $region21: #{tpu_custom_call.1} parent=11 // pred_check
          %p252 = pneg %p127
        $region22: #{tpu_custom_call.1} parent=11 // pred_check_branch
          %254 = sbr.rel (%p252) target = $region24
        $region23: #{tpu_custom_call.1} parent=11 // pred_region
          %s256 = ssub.s32 256, 256
          %257 = vsyncadd [#allocation9], %s256
          %s258 = sshll.u32 [#allocation8], 4
          %s259 = int_to_ptr.vmem [resolvable:$true] %s258
          %264 = dma.hbm_to_vmem [thread:$0]  %s3, 256, %s259, [#allocation9], 64, 64, 4
        $region24: #{tpu_custom_call.1} parent=11 // pred_fallthru
          _
      $region12: #{tpu_custom_call.1} parent=5 // pred_fallthru
        _
      %p265 = scmp.lt.s32.totalorder %s24, 2
      // Predicated region
      $region25: #{tpu_custom_call.1} parent=5 // pred_check
        %p266 = pneg %p265
      $region26: #{tpu_custom_call.1} parent=5 // pred_check_branch
        %268 = sbr.rel (%p266) target = $region28
      $region27: #{tpu_custom_call.1} parent=5 // pred_region
        // Predicated region
        $region29: #{tpu_custom_call.1} parent=27 // pred_check
          %p269 = pneg %p58
        $region30: #{tpu_custom_call.1} parent=27 // pred_check_branch
          %271 = sbr.rel (%p269) target = $region32
        $region31: #{tpu_custom_call.1} parent=27 // pred_region
          %s272 = sand.u32 %s48, 1
          %s273 = scalar_lea.sflag [#allocation3], %s272
          %s274 = sand.u32 %s48, 1
          %s275 = smul.addr %s274, 8
          %s276 = scalar_lea.vmem [#allocation2], %s275
          %s278 = ssub.s32 128, 128
          %279 = vsyncadd %s273, %s278
          %s280 = sadd.s32 %s32, %s31
          %s281 = smul.addr %s280, 128
          %s282 = scalar_lea.hbm %s0, %s281
          %s284 = sshll.u32 %s276, 4
          %s285 = int_to_ptr.vmem [resolvable:$true] %s284
          %287 = dma.hbm_to_vmem [thread:$0]  %s282, 128, %s285, %s273
        $region32: #{tpu_custom_call.1} parent=27 // pred_fallthru
          _
      $region28: #{tpu_custom_call.1} parent=5 // pred_fallthru
        _
      %p288 = scmp.le.s32.totalorder 1, %s24
      %p289 = scmp.lt.s32.totalorder %s24, 3
      %p290 = pnand %p288, %p289
      %p291 = pneg %p290
      // Predicated region
      $region33: #{tpu_custom_call.1} parent=5 // pred_check
        _
      $region34: #{tpu_custom_call.1} parent=5 // pred_check_branch
        %293 = sbr.rel (%p290) target = $region36
      $region35: #{tpu_custom_call.1} parent=5 // pred_region
        %s294 = ssub.s32 %s24, 1
        %s295 = sand.u32 %s51, 1
        %s296 = scalar_lea.sflag [#allocation3], %s295
        %s297 = sand.u32 %s51, 1
        %s298 = smul.addr %s297, 8
        %s299 = scalar_lea.vmem [#allocation2], %s298
        // Predicated region
        $region37: #{tpu_custom_call.1} parent=35 // pred_check
          %p300 = pneg %p64
        $region38: #{tpu_custom_call.1} parent=35 // pred_check_branch
          %302 = sbr.rel (%p300) target = $region40
        $region39: #{tpu_custom_call.1} parent=35 // pred_region
          %303 = dma.done %s296, 128
        $region40: #{tpu_custom_call.1} parent=35 // pred_fallthru
          _
        // Predicated region
        $region41: #{tpu_custom_call.1} parent=35 // pred_check
          %p304 = pneg %p85
        $region42: #{tpu_custom_call.1} parent=35 // pred_check_branch
          %306 = sbr.rel (%p304) target = $region44
        $region43: #{tpu_custom_call.1} parent=35 // pred_region
          %307 = dma.done [#allocation6], 256
        $region44: #{tpu_custom_call.1} parent=35 // pred_fallthru
          _
        // Predicated region
        $region45: #{tpu_custom_call.1} parent=35 // pred_check
          %p308 = pneg %p106
        $region46: #{tpu_custom_call.1} parent=35 // pred_check_branch
          %310 = sbr.rel (%p308) target = $region48
        $region47: #{tpu_custom_call.1} parent=35 // pred_region
          %311 = dma.done [#allocation6], 256
        $region48: #{tpu_custom_call.1} parent=35 // pred_fallthru
          _
        // Predicated region
        $region49: #{tpu_custom_call.1} parent=35 // pred_check
          %p312 = pneg %p127
        $region50: #{tpu_custom_call.1} parent=35 // pred_check_branch
          %314 = sbr.rel (%p312) target = $region52
        $region51: #{tpu_custom_call.1} parent=35 // pred_region
          %315 = dma.done [#allocation9], 256
        $region52: #{tpu_custom_call.1} parent=35 // pred_fallthru
          _
        %s316 = sand.u32 %s51, 1
        %s317 = scalar_lea.sflag [#allocation3], %s316
        %s318 = sand.u32 %s51, 1
        %s319 = smul.addr %s318, 8
        %s320 = scalar_lea.vmem [#allocation2], %s319
        %p321 = pneg %p64
        %p322 = pneg %p61
        %p323 = pneg %p85
        %p324 = pneg %p82
        %p325 = pneg %p106
        %p326 = pneg %p103
        %p327 = pneg %p127
        %p328 = pneg %p124
        %p329 = pneg %p155
        %p330 = pneg %p152
        %s331 = sand.u32 %s142, 1
        %s332 = scalar_lea.sflag [#allocation4], %s331
        %s333 = sand.u32 %s142, 1
        %s334 = smul.addr %s333, 8
        %s335 = scalar_lea.vmem [#allocation10], %s334
        %p336 = pneg %p183
        %p337 = pneg %p180
        %s338 = sand.u32 %s29, 1
        %s339 = scalar_lea.sflag [#allocation12], %s338
        %s340 = sand.u32 %s170, 1
        %s341 = smul.addr %s340, 8
        %s342 = scalar_lea.vmem [#allocation11], %s341
        %p343 = pneg %p211
        %p344 = pneg %p208
        %s345 = sand.u32 %s29, 1
        %s346 = scalar_lea.sflag [#allocation12], %s345
        %s347 = sand.u32 %s198, 1
        %s348 = smul.addr %s347, 8
        %s349 = scalar_lea.vmem [#allocation13], %s348
        %v351 = vld [vmem:[%s299] sm:$0xff]
        %v352 = vpack.c.bf16 %v351, %v351
        %v353 = vld [vmem:[#allocation5] sm:$0xf]
        %v354 = vld [vmem:[#allocation5 + $0x4] sm:$0xf]
        %v355 = vld [vmem:[#allocation5 + $0x8] sm:$0xf]
        %v356 = vld [vmem:[#allocation5 + $0xc] sm:$0xf]
        %v361 = vunpack.c.l.b16 %v353
        %v362 = vunpack.c.l.b16 %v354
        %v363 = vunpack.c.l.b16 %v355
        %v364 = vunpack.c.l.b16 %v356
        %v365 = vpack.c.b16 %v362, %v361
        %v366 = vpack.c.b16 %v364, %v363
        %vm369 = vcmask 261120
        %v371 = vsel %vm369, %v352, 0
        %373 = vmatprep.subr.bf16.mxu0 0
        %374 = vmatpush1.bf16.msra.mxu0 %v365
        %375 = vmatprep.subr.bf16.mxu0 0
        %376 = vmatpush1.bf16.msra.mxu0 %v366
        %377 = vmatprep.subr.bf16.mxu0 0
        %378 = vmatpush1.bf16.msra.mxu0 0
        %379 = vmatprep.subr.bf16.mxu0 0
        %380 = vmatpush1.bf16.msra.mxu0 0
        %381 = vmatprep.subr.bf16.mxu0 0
        %382 = vmatpush1.bf16.msra.mxu0 0
        %383 = vmatprep.subr.bf16.mxu0 0
        %384 = vmatpush1.bf16.msra.mxu0 0
        %385 = vmatprep.subr.bf16.mxu0 0
        %386 = vmatpush1.bf16.msra.mxu0 0
        %387 = vmatprep.subr.bf16.mxu0 0
        %388 = vmatpush1.bf16.msra.mxu0 0
        %389 = vmatprep.subr.bf16.mxu0 0
        %390 = vmatpush1.bf16.msra.mxu0 0
        %391 = vmatprep.subr.bf16.mxu0 0
        %392 = vmatpush1.bf16.msra.mxu0 0
        %393 = vmatprep.subr.bf16.mxu0 0
        %394 = vmatpush1.bf16.msra.mxu0 0
        %395 = vmatprep.subr.bf16.mxu0 0
        %396 = vmatpush1.bf16.msra.mxu0 0
        %397 = vmatprep.subr.bf16.mxu0 0
        %398 = vmatpush1.bf16.msra.mxu0 0
        %399 = vmatprep.subr.bf16.mxu0 0
        %400 = vmatpush1.bf16.msra.mxu0 0
        %401 = vmatprep.subr.bf16.mxu0 0
        %402 = vmatpush1.bf16.msra.mxu0 0
        %403 = vmatprep.subr.bf16.mxu0 0
        %404 = vmatpush1.bf16.msra.mxu0 0
        %405 = vmatprep.mubr.bf16.mxu0 0
        %406 = vmatmul.mubr.bf16.gmra.mrb[0].mxu0 %v371
        %v407 = vpop.f32.mrb[0].mxu0
        %v408 = vadd.f32 0.0, %v407
        %v409 = vpop.f32.mrb[0].mxu0
        %v410 = vpop.f32.mrb[0].mxu0
        %v411 = vpop.f32.mrb[0].mxu0
        %412 = vdwg.mxu0
        %v413 = vmul.f32 %v408, 0.25
        %v414 = vpack.c.bf16 %v413, %v413
        %416 = vrot.lane.b32.xlu0 %v414, 112
        %v417 = vpop.permute.xlu0 %416
        %v419 = vunpack.c.l.s4 1983009808
        %v420 = vunpack.c.0.s8 %v419
        %v421 = vlaneseq
        %v422 = vshrl.u32 %v421, 7
        %v423 = vsub.s32 %v420, %v422
        %v424 = vrot.slane %v414, %v423
        %v425 = vcombine.high %v424, 0
        %v427 = vunpack.c.l.s4 1934713408
        %v428 = vunpack.c.0.s8 %v427
        %v429 = vlaneseq
        %v430 = vshrl.u32 %v429, 7
        %v431 = vsub.s32 %v428, %v430
        %v432 = vrot.slane %v424, %v431
        %v434 = vunpack.c.l.s4 1934713408
        %v435 = vunpack.c.0.s8 %v434
        %v436 = vlaneseq
        %v437 = vshrl.u32 %v436, 7
        %v438 = vsub.s32 %v435, %v437
        %v439 = vrot.slane %v425, %v438
        %v440 = vcombine.high %v432, 0
        %v441 = vcombine.high %v439, 0
        %v444 = vunpack.c.l.s4 1983009808
        %v445 = vunpack.c.0.s8 %v444
        %v446 = vlaneseq
        %v447 = vshrl.u32 %v446, 7
        %v448 = vsub.s32 %v445, %v447
        %v449 = vrot.slane %v417, %v448
        %v450 = vcombine.high %v449, 0
        %v452 = vunpack.c.l.s4 1934713408
        %v453 = vunpack.c.0.s8 %v452
        %v454 = vlaneseq
        %v455 = vshrl.u32 %v454, 7
        %v456 = vsub.s32 %v453, %v455
        %v457 = vrot.slane %v449, %v456
        %v459 = vunpack.c.l.s4 1934713408
        %v460 = vunpack.c.0.s8 %v459
        %v461 = vlaneseq
        %v462 = vshrl.u32 %v461, 7
        %v463 = vsub.s32 %v460, %v462
        %v464 = vrot.slane %v450, %v463
        %v465 = vcombine.high %v457, 0
        %v466 = vcombine.high %v464, 0
        %v469 = vpack.i.b16 %v457, %v432
        %v471 = vshrl.u32 %v432, 16
        %v472 = vshrl.u32 %v457, 16
        %v473 = vpack.i.b16 %v472, %v471
        %v477 = vpack.i.b16 %v465, %v440
        %v479 = vshrl.u32 %v440, 16
        %v480 = vshrl.u32 %v465, 16
        %v481 = vpack.i.b16 %v480, %v479
        %v485 = vpack.i.b16 %v464, %v439
        %v487 = vshrl.u32 %v439, 16
        %v488 = vshrl.u32 %v464, 16
        %v489 = vpack.i.b16 %v488, %v487
        %v493 = vpack.i.b16 %v466, %v441
        %v495 = vshrl.u32 %v441, 16
        %v496 = vshrl.u32 %v466, 16
        %v497 = vpack.i.b16 %v496, %v495
        %v499 = vcombine.low %v469, %v485
        %v501 = vunpack.c.l.s4 1983009808
        %v502 = vunpack.c.0.s8 %v501
        %v503 = vlaneseq
        %v504 = vshrl.u32 %v503, 7
        %v505 = vsub.s32 %v502, %v504
        %v506 = vrot.slane %v499, %v505
        %v507 = vcombine.low %v477, %v493
        %v509 = vunpack.c.l.s4 1983009808
        %v510 = vunpack.c.0.s8 %v509
        %v511 = vlaneseq
        %v512 = vshrl.u32 %v511, 7
        %v513 = vsub.s32 %v510, %v512
        %v514 = vrot.slane %v507, %v513
        %v515 = vcombine.low %v506, %v514
        %v517 = vunpack.c.l.s4 1934713408
        %v518 = vunpack.c.0.s8 %v517
        %v519 = vlaneseq
        %v520 = vshrl.u32 %v519, 7
        %v521 = vsub.s32 %v518, %v520
        %v522 = vrot.slane %v515, %v521
        %v523 = vcombine.low %v473, %v489
        %v525 = vunpack.c.l.s4 1983009808
        %v526 = vunpack.c.0.s8 %v525
        %v527 = vlaneseq
        %v528 = vshrl.u32 %v527, 7
        %v529 = vsub.s32 %v526, %v528
        %v530 = vrot.slane %v523, %v529
        %v531 = vcombine.low %v481, %v497
        %v533 = vunpack.c.l.s4 1983009808
        %v534 = vunpack.c.0.s8 %v533
        %v535 = vlaneseq
        %v536 = vshrl.u32 %v535, 7
        %v537 = vsub.s32 %v534, %v536
        %v538 = vrot.slane %v531, %v537
        %v539 = vcombine.low %v530, %v538
        %v541 = vunpack.c.l.s4 1934713408
        %v542 = vunpack.c.0.s8 %v541
        %v543 = vlaneseq
        %v544 = vshrl.u32 %v543, 7
        %v545 = vsub.s32 %v542, %v544
        %v546 = vrot.slane %v539, %v545
        %v549 = vpack.i.b16 %v546, %v522
        %v551 = vshrl.u32 %v522, 16
        %v552 = vshrl.u32 %v546, 16
        %v553 = vpack.i.b16 %v552, %v551
        %vm555 = vcmask 125952
        %556 = vst.msk [vmem:[%s335] sm:$0xf] %vm555, %v549
        %557 = vst.msk [vmem:[%s335 + $0x4] sm:$0xf] %vm555, %v553
        %v558 = vld [vmem:[#allocation7] sm:$0xf]
        %v559 = vld [vmem:[#allocation7 + $0x4] sm:$0xf]
        %v560 = vld [vmem:[#allocation7 + $0x8] sm:$0xf]
        %v561 = vld [vmem:[#allocation7 + $0xc] sm:$0xf]
        %v566 = vunpack.c.l.b16 %v558
        %v567 = vunpack.c.l.b16 %v559
        %v568 = vunpack.c.l.b16 %v560
        %v569 = vunpack.c.l.b16 %v561
        %v570 = vpack.c.b16 %v567, %v566
        %v571 = vpack.c.b16 %v569, %v568
        %574 = vmatprep.subr.bf16.mxu0 0
        %575 = vmatpush1.bf16.msra.mxu0 %v570
        %576 = vmatprep.subr.bf16.mxu0 0
        %577 = vmatpush1.bf16.msra.mxu0 %v571
        %578 = vmatprep.subr.bf16.mxu0 0
        %579 = vmatpush1.bf16.msra.mxu0 0
        %580 = vmatprep.subr.bf16.mxu0 0
        %581 = vmatpush1.bf16.msra.mxu0 0
        %582 = vmatprep.subr.bf16.mxu0 0
        %583 = vmatpush1.bf16.msra.mxu0 0
        %584 = vmatprep.subr.bf16.mxu0 0
        %585 = vmatpush1.bf16.msra.mxu0 0
        %586 = vmatprep.subr.bf16.mxu0 0
        %587 = vmatpush1.bf16.msra.mxu0 0
        %588 = vmatprep.subr.bf16.mxu0 0
        %589 = vmatpush1.bf16.msra.mxu0 0
        %590 = vmatprep.subr.bf16.mxu0 0
        %591 = vmatpush1.bf16.msra.mxu0 0
        %592 = vmatprep.subr.bf16.mxu0 0
        %593 = vmatpush1.bf16.msra.mxu0 0
        %594 = vmatprep.subr.bf16.mxu0 0
        %595 = vmatpush1.bf16.msra.mxu0 0
        %596 = vmatprep.subr.bf16.mxu0 0
        %597 = vmatpush1.bf16.msra.mxu0 0
        %598 = vmatprep.subr.bf16.mxu0 0
        %599 = vmatpush1.bf16.msra.mxu0 0
        %600 = vmatprep.subr.bf16.mxu0 0
        %601 = vmatpush1.bf16.msra.mxu0 0
        %602 = vmatprep.subr.bf16.mxu0 0
        %603 = vmatpush1.bf16.msra.mxu0 0
        %604 = vmatprep.subr.bf16.mxu0 0
        %605 = vmatpush1.bf16.msra.mxu0 0
        %606 = vmatprep.mubr.bf16.mxu0 0
        %607 = vmatmul.mubr.bf16.gmra.mrb[0].mxu0 %v371
        %v608 = vpop.f32.mrb[0].mxu0
        %v609 = vadd.f32 0.0, %v608
        %v610 = vpop.f32.mrb[0].mxu0
        %v611 = vpop.f32.mrb[0].mxu0
        %v612 = vpop.f32.mrb[0].mxu0
        %613 = vdwg.mxu0
        %v614 = vpack.c.bf16 %v609, %v609
        %616 = vrot.lane.b32.xlu0 %v614, 112
        %v617 = vpop.permute.xlu0 %616
        %v619 = vunpack.c.l.s4 1983009808
        %v620 = vunpack.c.0.s8 %v619
        %v621 = vlaneseq
        %v622 = vshrl.u32 %v621, 7
        %v623 = vsub.s32 %v620, %v622
        %v624 = vrot.slane %v614, %v623
        %v625 = vcombine.high %v624, 0
        %v627 = vunpack.c.l.s4 1934713408
        %v628 = vunpack.c.0.s8 %v627
        %v629 = vlaneseq
        %v630 = vshrl.u32 %v629, 7
        %v631 = vsub.s32 %v628, %v630
        %v632 = vrot.slane %v624, %v631
        %v634 = vunpack.c.l.s4 1934713408
        %v635 = vunpack.c.0.s8 %v634
        %v636 = vlaneseq
        %v637 = vshrl.u32 %v636, 7
        %v638 = vsub.s32 %v635, %v637
        %v639 = vrot.slane %v625, %v638
        %v640 = vcombine.high %v632, 0
        %v641 = vcombine.high %v639, 0
        %v644 = vunpack.c.l.s4 1983009808
        %v645 = vunpack.c.0.s8 %v644
        %v646 = vlaneseq
        %v647 = vshrl.u32 %v646, 7
        %v648 = vsub.s32 %v645, %v647
        %v649 = vrot.slane %v617, %v648
        %v650 = vcombine.high %v649, 0
        %v652 = vunpack.c.l.s4 1934713408
        %v653 = vunpack.c.0.s8 %v652
        %v654 = vlaneseq
        %v655 = vshrl.u32 %v654, 7
        %v656 = vsub.s32 %v653, %v655
        %v657 = vrot.slane %v649, %v656
        %v659 = vunpack.c.l.s4 1934713408
        %v660 = vunpack.c.0.s8 %v659
        %v661 = vlaneseq
        %v662 = vshrl.u32 %v661, 7
        %v663 = vsub.s32 %v660, %v662
        %v664 = vrot.slane %v650, %v663
        %v665 = vcombine.high %v657, 0
        %v666 = vcombine.high %v664, 0
        %v669 = vpack.i.b16 %v657, %v632
        %v671 = vshrl.u32 %v632, 16
        %v672 = vshrl.u32 %v657, 16
        %v673 = vpack.i.b16 %v672, %v671
        %v677 = vpack.i.b16 %v665, %v640
        %v679 = vshrl.u32 %v640, 16
        %v680 = vshrl.u32 %v665, 16
        %v681 = vpack.i.b16 %v680, %v679
        %v685 = vpack.i.b16 %v664, %v639
        %v687 = vshrl.u32 %v639, 16
        %v688 = vshrl.u32 %v664, 16
        %v689 = vpack.i.b16 %v688, %v687
        %v693 = vpack.i.b16 %v666, %v641
        %v695 = vshrl.u32 %v641, 16
        %v696 = vshrl.u32 %v666, 16
        %v697 = vpack.i.b16 %v696, %v695
        %v699 = vcombine.low %v669, %v685
        %v701 = vunpack.c.l.s4 1983009808
        %v702 = vunpack.c.0.s8 %v701
        %v703 = vlaneseq
        %v704 = vshrl.u32 %v703, 7
        %v705 = vsub.s32 %v702, %v704
        %v706 = vrot.slane %v699, %v705
        %v707 = vcombine.low %v677, %v693
        %v709 = vunpack.c.l.s4 1983009808
        %v710 = vunpack.c.0.s8 %v709
        %v711 = vlaneseq
        %v712 = vshrl.u32 %v711, 7
        %v713 = vsub.s32 %v710, %v712
        %v714 = vrot.slane %v707, %v713
        %v715 = vcombine.low %v706, %v714
        %v717 = vunpack.c.l.s4 1934713408
        %v718 = vunpack.c.0.s8 %v717
        %v719 = vlaneseq
        %v720 = vshrl.u32 %v719, 7
        %v721 = vsub.s32 %v718, %v720
        %v722 = vrot.slane %v715, %v721
        %v723 = vcombine.low %v673, %v689
        %v725 = vunpack.c.l.s4 1983009808
        %v726 = vunpack.c.0.s8 %v725
        %v727 = vlaneseq
        %v728 = vshrl.u32 %v727, 7
        %v729 = vsub.s32 %v726, %v728
        %v730 = vrot.slane %v723, %v729
        %v731 = vcombine.low %v681, %v697
        %v733 = vunpack.c.l.s4 1983009808
        %v734 = vunpack.c.0.s8 %v733
        %v735 = vlaneseq
        %v736 = vshrl.u32 %v735, 7
        %v737 = vsub.s32 %v734, %v736
        %v738 = vrot.slane %v731, %v737
        %v739 = vcombine.low %v730, %v738
        %v741 = vunpack.c.l.s4 1934713408
        %v742 = vunpack.c.0.s8 %v741
        %v743 = vlaneseq
        %v744 = vshrl.u32 %v743, 7
        %v745 = vsub.s32 %v742, %v744
        %v746 = vrot.slane %v739, %v745
        %v749 = vpack.i.b16 %v746, %v722
        %v751 = vshrl.u32 %v722, 16
        %v752 = vshrl.u32 %v746, 16
        %v753 = vpack.i.b16 %v752, %v751
        %755 = vst.msk [vmem:[%s342] sm:$0xf] %vm555, %v749
        %756 = vst.msk [vmem:[%s342 + $0x4] sm:$0xf] %vm555, %v753
        %v757 = vld [vmem:[#allocation8] sm:$0xf]
        %v758 = vld [vmem:[#allocation8 + $0x4] sm:$0xf]
        %v759 = vld [vmem:[#allocation8 + $0x8] sm:$0xf]
        %v760 = vld [vmem:[#allocation8 + $0xc] sm:$0xf]
        %v765 = vunpack.c.l.b16 %v757
        %v766 = vunpack.c.l.b16 %v758
        %v767 = vunpack.c.l.b16 %v759
        %v768 = vunpack.c.l.b16 %v760
        %v769 = vpack.c.b16 %v766, %v765
        %v770 = vpack.c.b16 %v768, %v767
        %773 = vmatprep.subr.bf16.mxu0 0
        %774 = vmatpush1.bf16.msra.mxu0 %v769
        %775 = vmatprep.subr.bf16.mxu0 0
        %776 = vmatpush1.bf16.msra.mxu0 %v770
        %777 = vmatprep.subr.bf16.mxu0 0
        %778 = vmatpush1.bf16.msra.mxu0 0
        %779 = vmatprep.subr.bf16.mxu0 0
        %780 = vmatpush1.bf16.msra.mxu0 0
        %781 = vmatprep.subr.bf16.mxu0 0
        %782 = vmatpush1.bf16.msra.mxu0 0
        %783 = vmatprep.subr.bf16.mxu0 0
        %784 = vmatpush1.bf16.msra.mxu0 0
        %785 = vmatprep.subr.bf16.mxu0 0
        %786 = vmatpush1.bf16.msra.mxu0 0
        %787 = vmatprep.subr.bf16.mxu0 0
        %788 = vmatpush1.bf16.msra.mxu0 0
        %789 = vmatprep.subr.bf16.mxu0 0
        %790 = vmatpush1.bf16.msra.mxu0 0
        %791 = vmatprep.subr.bf16.mxu0 0
        %792 = vmatpush1.bf16.msra.mxu0 0
        %793 = vmatprep.subr.bf16.mxu0 0
        %794 = vmatpush1.bf16.msra.mxu0 0
        %795 = vmatprep.subr.bf16.mxu0 0
        %796 = vmatpush1.bf16.msra.mxu0 0
        %797 = vmatprep.subr.bf16.mxu0 0
        %798 = vmatpush1.bf16.msra.mxu0 0
        %799 = vmatprep.subr.bf16.mxu0 0
        %800 = vmatpush1.bf16.msra.mxu0 0
        %801 = vmatprep.subr.bf16.mxu0 0
        %802 = vmatpush1.bf16.msra.mxu0 0
        %803 = vmatprep.subr.bf16.mxu0 0
        %804 = vmatpush1.bf16.msra.mxu0 0
        %805 = vmatprep.mubr.bf16.mxu0 0
        %806 = vmatmul.mubr.bf16.gmra.mrb[0].mxu0 %v371
        %v807 = vpop.f32.mrb[0].mxu0
        %v808 = vadd.f32 0.0, %v807
        %v809 = vpop.f32.mrb[0].mxu0
        %v810 = vpop.f32.mrb[0].mxu0
        %v811 = vpop.f32.mrb[0].mxu0
        %812 = vdwg.mxu0
        %v813 = vpack.c.bf16 %v808, %v808
        %815 = vrot.lane.b32.xlu0 %v813, 112
        %v816 = vpop.permute.xlu0 %815
        %v818 = vunpack.c.l.s4 1983009808
        %v819 = vunpack.c.0.s8 %v818
        %v820 = vlaneseq
        %v821 = vshrl.u32 %v820, 7
        %v822 = vsub.s32 %v819, %v821
        %v823 = vrot.slane %v813, %v822
        %v824 = vcombine.high %v823, 0
        %v826 = vunpack.c.l.s4 1934713408
        %v827 = vunpack.c.0.s8 %v826
        %v828 = vlaneseq
        %v829 = vshrl.u32 %v828, 7
        %v830 = vsub.s32 %v827, %v829
        %v831 = vrot.slane %v823, %v830
        %v833 = vunpack.c.l.s4 1934713408
        %v834 = vunpack.c.0.s8 %v833
        %v835 = vlaneseq
        %v836 = vshrl.u32 %v835, 7
        %v837 = vsub.s32 %v834, %v836
        %v838 = vrot.slane %v824, %v837
        %v839 = vcombine.high %v831, 0
        %v840 = vcombine.high %v838, 0
        %v843 = vunpack.c.l.s4 1983009808
        %v844 = vunpack.c.0.s8 %v843
        %v845 = vlaneseq
        %v846 = vshrl.u32 %v845, 7
        %v847 = vsub.s32 %v844, %v846
        %v848 = vrot.slane %v816, %v847
        %v849 = vcombine.high %v848, 0
        %v851 = vunpack.c.l.s4 1934713408
        %v852 = vunpack.c.0.s8 %v851
        %v853 = vlaneseq
        %v854 = vshrl.u32 %v853, 7
        %v855 = vsub.s32 %v852, %v854
        %v856 = vrot.slane %v848, %v855
        %v858 = vunpack.c.l.s4 1934713408
        %v859 = vunpack.c.0.s8 %v858
        %v860 = vlaneseq
        %v861 = vshrl.u32 %v860, 7
        %v862 = vsub.s32 %v859, %v861
        %v863 = vrot.slane %v849, %v862
        %v864 = vcombine.high %v856, 0
        %v865 = vcombine.high %v863, 0
        %v868 = vpack.i.b16 %v856, %v831
        %v870 = vshrl.u32 %v831, 16
        %v871 = vshrl.u32 %v856, 16
        %v872 = vpack.i.b16 %v871, %v870
        %v876 = vpack.i.b16 %v864, %v839
        %v878 = vshrl.u32 %v839, 16
        %v879 = vshrl.u32 %v864, 16
        %v880 = vpack.i.b16 %v879, %v878
        %v884 = vpack.i.b16 %v863, %v838
        %v886 = vshrl.u32 %v838, 16
        %v887 = vshrl.u32 %v863, 16
        %v888 = vpack.i.b16 %v887, %v886
        %v892 = vpack.i.b16 %v865, %v840
        %v894 = vshrl.u32 %v840, 16
        %v895 = vshrl.u32 %v865, 16
        %v896 = vpack.i.b16 %v895, %v894
        %v898 = vcombine.low %v868, %v884
        %v900 = vunpack.c.l.s4 1983009808
        %v901 = vunpack.c.0.s8 %v900
        %v902 = vlaneseq
        %v903 = vshrl.u32 %v902, 7
        %v904 = vsub.s32 %v901, %v903
        %v905 = vrot.slane %v898, %v904
        %v906 = vcombine.low %v876, %v892
        %v908 = vunpack.c.l.s4 1983009808
        %v909 = vunpack.c.0.s8 %v908
        %v910 = vlaneseq
        %v911 = vshrl.u32 %v910, 7
        %v912 = vsub.s32 %v909, %v911
        %v913 = vrot.slane %v906, %v912
        %v914 = vcombine.low %v905, %v913
        %v916 = vunpack.c.l.s4 1934713408
        %v917 = vunpack.c.0.s8 %v916
        %v918 = vlaneseq
        %v919 = vshrl.u32 %v918, 7
        %v920 = vsub.s32 %v917, %v919
        %v921 = vrot.slane %v914, %v920
        %v922 = vcombine.low %v872, %v888
        %v924 = vunpack.c.l.s4 1983009808
        %v925 = vunpack.c.0.s8 %v924
        %v926 = vlaneseq
        %v927 = vshrl.u32 %v926, 7
        %v928 = vsub.s32 %v925, %v927
        %v929 = vrot.slane %v922, %v928
        %v930 = vcombine.low %v880, %v896
        %v932 = vunpack.c.l.s4 1983009808
        %v933 = vunpack.c.0.s8 %v932
        %v934 = vlaneseq
        %v935 = vshrl.u32 %v934, 7
        %v936 = vsub.s32 %v933, %v935
        %v937 = vrot.slane %v930, %v936
        %v938 = vcombine.low %v929, %v937
        %v940 = vunpack.c.l.s4 1934713408
        %v941 = vunpack.c.0.s8 %v940
        %v942 = vlaneseq
        %v943 = vshrl.u32 %v942, 7
        %v944 = vsub.s32 %v941, %v943
        %v945 = vrot.slane %v938, %v944
        %v948 = vpack.i.b16 %v945, %v921
        %v950 = vshrl.u32 %v921, 16
        %v951 = vshrl.u32 %v945, 16
        %v952 = vpack.i.b16 %v951, %v950
        %954 = vst.msk [vmem:[%s349] sm:$0xf] %vm555, %v948
        %955 = vst.msk [vmem:[%s349 + $0x4] sm:$0xf] %vm555, %v952
        %s956 = sand.u32 %s142, 1
        %s957 = scalar_lea.sflag [#allocation4], %s956
        %s958 = sand.u32 %s142, 1
        %s959 = smul.addr %s958, 8
        %s960 = scalar_lea.vmem [#allocation10], %s959
        %s961 = sand.u32 %s29, 1
        %s962 = scalar_lea.sflag [#allocation12], %s961
        %s963 = sand.u32 %s170, 1
        %s964 = smul.addr %s963, 8
        %s965 = scalar_lea.vmem [#allocation11], %s964
        %s966 = sand.u32 %s29, 1
        %s967 = scalar_lea.sflag [#allocation12], %s966
        %s968 = sand.u32 %s198, 1
        %s969 = smul.addr %s968, 8
        %s970 = scalar_lea.vmem [#allocation13], %s969
        // Predicated region
        $region53: #{tpu_custom_call.1} parent=35 // pred_check
          %p971 = pneg %p152
        $region54: #{tpu_custom_call.1} parent=35 // pred_check_branch
          %973 = sbr.rel (%p971) target = $region56
        $region55: #{tpu_custom_call.1} parent=35 // pred_region
          %s975 = ssub.s32 128, 128
          %976 = vsyncadd %s957, %s975
          %s977 = smul.addr %s33, 2
          %s978 = sadd.s32 %s34, %s977
          %s979 = smul.addr %s978, 64
          %s980 = scalar_lea.hbm %s4, %s979
          %s981 = sshll.u32 %s960, 4
          %s982 = int_to_ptr.vmem [resolvable:$true] %s981
          %987 = dma.vmem_to_hbm [thread:$0]  %s982, 128, %s980, %s957, 64, 64, 4
        $region56: #{tpu_custom_call.1} parent=35 // pred_fallthru
          _
        // Predicated region
        $region57: #{tpu_custom_call.1} parent=35 // pred_check
          %p988 = pneg %p180
        $region58: #{tpu_custom_call.1} parent=35 // pred_check_branch
          %990 = sbr.rel (%p988) target = $region60
        $region59: #{tpu_custom_call.1} parent=35 // pred_region
          %s992 = ssub.s32 128, 128
          %993 = vsyncadd %s962, %s992
          %s994 = smul.addr %s33, 2
          %s995 = sadd.s32 %s34, %s994
          %s996 = smul.addr %s995, 64
          %s997 = scalar_lea.hbm %s5, %s996
          %s998 = sshll.u32 %s965, 4
          %s999 = int_to_ptr.vmem [resolvable:$true] %s998
          %1004 = dma.vmem_to_hbm [thread:$0]  %s999, 128, %s997, %s962, 64, 64, 4
        $region60: #{tpu_custom_call.1} parent=35 // pred_fallthru
          _
        // Predicated region
        $region61: #{tpu_custom_call.1} parent=35 // pred_check
          %p1005 = pneg %p208
        $region62: #{tpu_custom_call.1} parent=35 // pred_check_branch
          %1007 = sbr.rel (%p1005) target = $region64
        $region63: #{tpu_custom_call.1} parent=35 // pred_region
          %s1009 = ssub.s32 128, 128
          %1010 = vsyncadd %s967, %s1009
          %s1011 = smul.addr %s33, 2
          %s1012 = sadd.s32 %s34, %s1011
          %s1013 = smul.addr %s1012, 64
          %s1014 = scalar_lea.hbm %s6, %s1013
          %s1015 = sshll.u32 %s970, 4
          %s1016 = int_to_ptr.vmem [resolvable:$true] %s1015
          %1021 = dma.vmem_to_hbm [thread:$0]  %s1016, 128, %s1014, %s967, 64, 64, 4
        $region64: #{tpu_custom_call.1} parent=35 // pred_fallthru
          _
      $region36: #{tpu_custom_call.1} parent=5 // pred_fallthru
        _
      %p1022 = scmp.le.s32.totalorder 2, %s24
      // Predicated region
      $region65: #{tpu_custom_call.1} parent=5 // pred_check
        %p1023 = pneg %p1022
      $region66: #{tpu_custom_call.1} parent=5 // pred_check_branch
        %1025 = sbr.rel (%p1023) target = $region68
      $region67: #{tpu_custom_call.1} parent=5 // pred_region
        %s1026 = ssub.s32 %s24, 2
        // Predicated region
        $region69: #{tpu_custom_call.1} parent=67 // pred_check
          %p1027 = pneg %p158
        $region70: #{tpu_custom_call.1} parent=67 // pred_check_branch
          %1029 = sbr.rel (%p1027) target = $region72
        $region71: #{tpu_custom_call.1} parent=67 // pred_region
          %s1030 = sand.u32 %s143, 1
          %s1031 = scalar_lea.sflag [#allocation4], %s1030
          %s1032 = sand.u32 %s143, 1
          %s1033 = smul.addr %s1032, 8
          %s1034 = scalar_lea.vmem [#allocation10], %s1033
          %1035 = dma.done %s1031, 128
        $region72: #{tpu_custom_call.1} parent=67 // pred_fallthru
          _
        // Predicated region
        $region73: #{tpu_custom_call.1} parent=67 // pred_check
          %p1036 = pneg %p186
        $region74: #{tpu_custom_call.1} parent=67 // pred_check_branch
          %1038 = sbr.rel (%p1036) target = $region76
        $region75: #{tpu_custom_call.1} parent=67 // pred_region
          %s1039 = sand.u32 %s30, 1
          %s1040 = scalar_lea.sflag [#allocation12], %s1039
          %s1041 = sand.u32 %s171, 1
          %s1042 = smul.addr %s1041, 8
          %s1043 = scalar_lea.vmem [#allocation11], %s1042
          %1044 = dma.done %s1040, 128
        $region76: #{tpu_custom_call.1} parent=67 // pred_fallthru
          _
        // Predicated region
        $region77: #{tpu_custom_call.1} parent=67 // pred_check
          %p1045 = pneg %p214
        $region78: #{tpu_custom_call.1} parent=67 // pred_check_branch
          %1047 = sbr.rel (%p1045) target = $region80
        $region79: #{tpu_custom_call.1} parent=67 // pred_region
          %s1048 = sand.u32 %s30, 1
          %s1049 = scalar_lea.sflag [#allocation12], %s1048
          %s1050 = sand.u32 %s199, 1
          %s1051 = smul.addr %s1050, 8
          %s1052 = scalar_lea.vmem [#allocation13], %s1051
          %1053 = dma.done %s1049, 128
        $region80: #{tpu_custom_call.1} parent=67 // pred_fallthru
          _
      $region68: #{tpu_custom_call.1} parent=5 // pred_fallthru
        _
    $region6: #{tpu_custom_call.1} parent=1 // loop_footer
      %s28 = sadd.s32 1, %s24
    $region7: #{tpu_custom_call.1} parent=1 // loop_footer_branch
      %23 = sbr.rel target = $region3
    $region8: #{tpu_custom_call.1} parent=1 // loop_exit
      _
    %1054 = vsyncpa [#allocation3], 1
    %s1055 = scalar_lea.sflag [#allocation3], 1
    %1056 = vsyncpa %s1055, 1
    %1057 = vsyncpa [#allocation6], 1
    %1058 = vsyncpa [#allocation9], 1
    %1059 = vsyncpa [#allocation4], 1
    %s1060 = scalar_lea.sflag [#allocation4], 1
    %1061 = vsyncpa %s1060, 1
    %1062 = vsyncpa [#allocation12], 1
    %s1063 = scalar_lea.sflag [#allocation12], 1
    %1064 = vsyncpa %s1063, 1

</llo_original>
